<compile_context>
chip_gen: v6e
topology: v6e:2x2x1
jax: 0.10.0
libtpu: 0.0.40
codegen_flags: <defaults>
</compile_context>

<pallas_src>
import jax
import jax.numpy as jnp
from jax import lax
from jax.experimental import pallas as pl
from jax.experimental.pallas import tpu as pltpu


def _make_fieldwise_linear_kernel(num_sparse, c_total, offsets, cast_raw, w_dtype):
    # Contract the last (feature) dim of both operands: (1, K) x (blk, K) -> (1, blk).
    dimnums = (((1,), (1,)), ((), ()))

    def kernel(raw_ref, wsp_ref, wrow_ref, o_ref):
        # raw_ref : [blk, dim]      first `num_sparse` cols are category ids (as floats)
        # wsp_ref : [1, C_total]    concatenated per-field embedding weights
        # wrow_ref: [1, dim]        dense Linear weight, zero-padded over the sparse cols
        # o_ref   : [1, blk]        logits, lane-major (unmasked lane-dense store)
        rows = raw_ref.shape[0]
        raw = raw_ref[...]
        raw_c = raw.astype(w_dtype) if cast_raw else raw

        # Dense contribution on the MXU: full-width dot against the zero-padded
        # weight row -> no unaligned lane slice, no (blk, dense_dims) intermediate.
        acc = lax.dot_general(wrow_ref[...], raw_c, dimnums,
                              preferred_element_type=jnp.float32)

        # Sparse contribution: ONE multi-hot over the concatenated table and ONE
        # MXU contraction.  Each field's id is shifted by its table offset so all
        # fields land in disjoint ranges of the same [blk, C_total] multi-hot.
        # (Out-of-range / negative ids simply match nothing and contribute 0,
        #  unlike torch.nn.Embedding which would raise.)
        iota = lax.broadcasted_iota(jnp.int32, (rows, c_total), 1)
        multihot = None
        for i in range(num_sparse):
            gid = raw[:, i:i + 1].astype(jnp.int32) + offsets[i]    # [blk, 1]
            hit = (gid == iota).astype(w_dtype)                      # [blk, C_total]
            multihot = hit if multihot is None else multihot + hit
        acc = acc + lax.dot_general(wsp_ref[...], multihot, dimnums,
                                    preferred_element_type=jnp.float32)

        o_ref[...] = acc.astype(o_ref.dtype)

    return kernel


def _vmem_tile_bytes(rows, cols, itemsize):
    """VMEM footprint of a (rows, cols) buffer after (8, 128) tiling/padding."""
    return (-(-rows // 8) * 8) * (-(-cols // 128) * 128) * itemsize


def _round_up(v, m):
    return -(-v // m) * m


def fieldwise_linear_pallas(raw_feat, sparse_tables, dense_weight, *, block_b=16384):
    """raw_feat: [..., S + dense_dims]; sparse_tables: tuple of [card_i, 1];
    dense_weight: nn.Linear(dense_dims, 1, bias=False).weight, i.e. [1, dense_dims]."""
    leading = raw_feat.shape[:-1]
    dim = raw_feat.shape[-1]
    num_sparse = len(sparse_tables)
    dense_dims = dim - num_sparse
    assert num_sparse >= 1 and dense_dims >= 1, (num_sparse, dense_dims)

    x = raw_feat.reshape(-1, dim)
    b_total = x.shape[0]

    cards = tuple(int(t.shape[0]) for t in sparse_tables)
    offsets, off = [], 0
    for c in cards:
        offsets.append(off)
        off += c
    c_total = off

    # Common weight dtype (bf16 callers stay bf16 end-to-end; demo is f32).
    w_dtype = jnp.result_type(*(jnp.asarray(t).dtype for t in sparse_tables),
                              jnp.asarray(dense_weight).dtype)
    w_sparse = jnp.concatenate(
        [jnp.asarray(t, dtype=w_dtype).reshape(1, -1) for t in sparse_tables],
        axis=1)                                                     # [1, C_total]
    # Zero-padded full-width dense weight row: zeros over the sparse columns.
    w_row = jnp.zeros((1, dim), dtype=w_dtype)
    w_row = w_row.at[:, num_sparse:].set(
        jnp.asarray(dense_weight, dtype=w_dtype).reshape(1, dense_dims))

    # NOTE: if raw_feat is bf16/fp16, ids above the mantissa range are not exactly
    # representable and the int cast silently yields wrong indices; feed ids in
    # f32 (or int-valued f32) from the caller.
    cast_raw = (x.dtype != w_dtype)

    out_dtype = jnp.result_type(raw_feat.dtype, w_dtype)
    in_isz = x.dtype.itemsize
    out_isz = jnp.dtype(out_dtype).itemsize
    w_isz = jnp.dtype(w_dtype).itemsize

    # ---- generation-aware VMEM budget & batch-tile selection ----------------
    try:
        vmem_cap = int(pltpu.get_tpu_info().vmem_capacity_bytes)
    except Exception:
        vmem_cap = 64 << 20                       # conservative fallback (v7x-sized)
    budget = min(int(vmem_cap * 0.4), 56 << 20)   # ~51 MiB v5e/v6e, ~25 MiB v7x

    def working_set(b):
        # double-buffered in/out tiles + resident weights (2 bufs each) + the
        # in-kernel intermediates that actually remain (multi-hot, id column,
        # f32 accumulator).  No full-tile fp32 copies / dense slices any more.
        return (2 * _vmem_tile_bytes(b, dim, in_isz)
                + 2 * _vmem_tile_bytes(1, b, out_isz)
                + 2 * (_vmem_tile_bytes(1, c_total, w_isz)
                       + _vmem_tile_bytes(1, dim, w_isz))
                + _vmem_tile_bytes(b, c_total, w_isz)
                + _vmem_tile_bytes(b, num_sparse, 4)
                + _vmem_tile_bytes(1, b, 4))

    blk = max(128, (min(block_b, 1 << 16) // 128) * 128)   # multiple of 128 -> lane-dense out
    while blk > 128 and working_set(blk) > budget:
        blk = max(128, ((blk // 2) // 128) * 128)

    if b_total <= blk:
        if b_total <= 256:
            blk = b_total                                   # one tiny block; megacore irrelevant
        else:
            # keep grid >= 2 so both v7x TensorCores get a share of the batch
            blk = max(128, _round_up(pl.cdiv(b_total, 2), 128))
    grid = pl.cdiv(b_total, blk)          # no jnp.pad: last partial block is masked by Pallas

    vmem_need = working_set(blk)
    vmem_limit = None
    if vmem_need > (12 << 20):            # only raise above the smallest scoped default
        vmem_limit = int(min(vmem_need + (8 << 20), int(vmem_cap * 0.75)))  # 48 MiB cap on v7x

    cost = pl.CostEstimate(
        flops=int(2 * b_total * (dim + c_total)),
        transcendentals=0,
        bytes_accessed=int(b_total * dim * in_isz + b_total * out_isz
                           + (c_total + dim) * w_isz),
    )

    kernel = _make_fieldwise_linear_kernel(num_sparse, c_total, tuple(offsets),
                                           cast_raw, w_dtype)

    out = pl.pallas_call(
        kernel,
        out_shape=jax.ShapeDtypeStruct((1, b_total), out_dtype),
        grid_spec=pltpu.PrefetchScalarGridSpec(
            num_scalar_prefetch=0,
            grid=(grid,),
            in_specs=[
                pl.BlockSpec((blk, dim), lambda i: (i, 0)),      # batch tile of raw features
                pl.BlockSpec((1, c_total), lambda i: (0, 0)),    # all sparse weights (resident)
                pl.BlockSpec((1, dim), lambda i: (0, 0)),        # zero-padded dense weight row
            ],
            out_specs=pl.BlockSpec((1, blk), lambda i: (0, i)),  # lane-dense logit row
        ),
        compiler_params=pltpu.CompilerParams(
            dimension_semantics=("parallel",),                   # lets v7x split over 2 TCs
            vmem_limit_bytes=vmem_limit,
        ),
        cost_estimate=cost,
    )(x, w_sparse, w_row)

    return out[0].reshape(leading)


def fieldwise_linear_ref(raw_feat, sparse_tables, dense_weight):
    """Pure-JAX mirror of the PyTorch FieldwiseLinear.forward."""
    num_sparse = len(sparse_tables)
    sparse_idx = raw_feat[..., :num_sparse].astype(jnp.int32)
    dense_feat = raw_feat[..., num_sparse:]
    logits = None
    for i, table in enumerate(sparse_tables):
        emb = table[sparse_idx[..., i]]                     # [..., 1]
        logits = emb if logits is None else logits + emb
    w = jnp.asarray(dense_weight).reshape(1, -1)
    logits = logits + jnp.matmul(dense_feat, w.T)           # [..., 1]
    return logits[..., 0]


if __name__ == "__main__":
    key = jax.random.PRNGKey(0)
    k_idx, k_dense, k_emb, k_fc, k2_idx, k2_dense = jax.random.split(key, 6)

    cardinalities = (7, 11, 5)           # three sparse fields
    num_sparse = len(cardinalities)
    dense_dims = 13
    dim = num_sparse + dense_dims        # 16
    leading = (2, 4)                     # flattened batch = 8

    idx_keys = jax.random.split(k_idx, num_sparse)
    emb_keys = jax.random.split(k_emb, num_sparse)

    sparse_cols = jnp.stack(
        [jax.random.randint(idx_keys[i], leading, 0, cardinalities[i]).astype(jnp.float32)
         for i in range(num_sparse)], axis=-1)                        # [2, 4, 3]
    dense_feat = jax.random.normal(k_dense, leading + (dense_dims,), dtype=jnp.float32)
    raw_feat = jnp.concatenate([sparse_cols, dense_feat], axis=-1)    # [2, 4, 16]

    # Parameters matching the PyTorch module: per-field [card, 1] embedding
    # tables plus a bias-free Linear(dense_dims, 1) weight of shape [1, dense_dims].
    sparse_tables = tuple(
        0.1 * jax.random.normal(emb_keys[i], (cardinalities[i], 1), dtype=jnp.float32)
        for i in range(num_sparse))
    dense_weight = 0.1 * jax.random.normal(k_fc, (1, dense_dims), dtype=jnp.float32)

    out = fieldwise_linear_pallas(raw_feat, sparse_tables, dense_weight)
    out = jax.block_until_ready(out)
    ref = fieldwise_linear_ref(raw_feat, sparse_tables, dense_weight)
    assert out.shape == leading, (out.shape, leading)
    assert jnp.allclose(out, ref, atol=1e-5, rtol=1e-5), float(jnp.max(jnp.abs(out - ref)))

    # Second check: a batch that does not divide the block size, exercising the
    # no-pad partial-block path (grid = cdiv, masked writeback on the last tile)
    # and the grid >= 2 selection path (333 rows > 256).
    leading2 = (37, 9)                   # flattened batch = 333
    idx2_keys = jax.random.split(k2_idx, num_sparse)
    sparse2 = jnp.stack(
        [jax.random.randint(idx2_keys[i], leading2, 0, cardinalities[i]).astype(jnp.float32)
         for i in range(num_sparse)], axis=-1)
    dense2 = jax.random.normal(k2_dense, leading2 + (dense_dims,), dtype=jnp.float32)
    raw2 = jnp.concatenate([sparse2, dense2], axis=-1)
    out2 = jax.block_until_ready(
        fieldwise_linear_pallas(raw2, sparse_tables, dense_weight))
    ref2 = fieldwise_linear_ref(raw2, sparse_tables, dense_weight)
    assert out2.shape == leading2, (out2.shape, leading2)
    assert jnp.allclose(out2, ref2, atol=1e-5, rtol=1e-5), float(jnp.max(jnp.abs(out2 - ref2)))

    # Third check: explicit small block to force a multi-step grid.
    out3 = jax.block_until_ready(
        fieldwise_linear_pallas(raw2, sparse_tables, dense_weight, block_b=128))
    assert jnp.allclose(out3, ref2, atol=1e-5, rtol=1e-5), float(jnp.max(jnp.abs(out3 - ref2)))

    print("KERNEL_OK")
</pallas_src>

<mosaic_0001>
module attributes {stable_mosaic.version = 11 : i64} {
  func.func @kernel(%arg0: i32, %arg1: memref<8x16xf32, #tpu.memory_space<vmem>>, %arg2: memref<1x23xf32, #tpu.memory_space<vmem>>, %arg3: memref<1x16xf32, #tpu.memory_space<vmem>>, %arg4: memref<1x8xf32, #tpu.memory_space<vmem>>) attributes {dimension_semantics = [#tpu.dimension_semantics<parallel>], iteration_bounds = array<i64: 1>, scalar_prefetch = 0 : i64, scratch_operands = 0 : i64, tpu.core_type = #tpu.core_type<tc>, window_params = [{transform_indices = @transform_0, window_bounds = array<i64: 8, 16>}, {pipeline_mode = #tpu.pipeline_mode<synchronous>, transform_indices = @transform_1, window_bounds = array<i64: 1, 23>}, {pipeline_mode = #tpu.pipeline_mode<synchronous>, transform_indices = @transform_2, window_bounds = array<i64: 1, 16>}, {transform_indices = @transform_3, window_bounds = array<i64: 1, 8>}]} {
    %c0 = arith.constant 0 : index
    %c0_0 = arith.constant 0 : index
    %0 = vector.load %arg1[%c0, %c0_0] : memref<8x16xf32, #tpu.memory_space<vmem>>, vector<8x16xf32>
    %c0_1 = arith.constant 0 : index
    %c0_2 = arith.constant 0 : index
    %1 = vector.load %arg3[%c0_1, %c0_2] : memref<1x16xf32, #tpu.memory_space<vmem>>, vector<1x16xf32>
    %cst = arith.constant dense<0.000000e+00> : vector<1x8xf32>
    %2 = tpu.matmul %1, %0, %cst {dimension_numbers = #tpu.dot_dimension_numbers<[1], [1], [0], [0], [0, 0, 1, 0], [], []>} : vector<1x16xf32>, vector<8x16xf32>, vector<1x8xf32> -> vector<1x8xf32>
    %3 = tpu.iota {dimensions = array<i32: 1>} : vector<8x23xi32>
    %4 = vector.extract_strided_slice %0 {offsets = [0, 0], sizes = [8, 1], strides = [1, 1]} : vector<8x16xf32> to vector<8x1xf32>
    %5 = arith.fptosi %4 : vector<8x1xf32> to vector<8x1xi32>
    %c0_i32 = arith.constant 0 : i32
    %6 = vector.broadcast %c0_i32 : i32 to vector<8x1xi32>
    %7 = arith.addi %5, %6 : vector<8x1xi32>
    %8 = vector.broadcast %7 : vector<8x1xi32> to vector<8x23xi32>
    %9 = arith.cmpi eq, %8, %3 : vector<8x23xi32>
    %10 = arith.extui %9 : vector<8x23xi1> to vector<8x23xi32>
    %11 = arith.sitofp %10 : vector<8x23xi32> to vector<8x23xf32>
    %12 = vector.extract_strided_slice %0 {offsets = [0, 1], sizes = [8, 1], strides = [1, 1]} : vector<8x16xf32> to vector<8x1xf32>
    %13 = arith.fptosi %12 : vector<8x1xf32> to vector<8x1xi32>
    %c7_i32 = arith.constant 7 : i32
    %14 = vector.broadcast %c7_i32 : i32 to vector<8x1xi32>
    %15 = arith.addi %13, %14 : vector<8x1xi32>
    %16 = vector.broadcast %15 : vector<8x1xi32> to vector<8x23xi32>
    %17 = arith.cmpi eq, %16, %3 : vector<8x23xi32>
    %18 = arith.extui %17 : vector<8x23xi1> to vector<8x23xi32>
    %19 = arith.sitofp %18 : vector<8x23xi32> to vector<8x23xf32>
    %20 = arith.addf %11, %19 : vector<8x23xf32>
    %21 = vector.extract_strided_slice %0 {offsets = [0, 2], sizes = [8, 1], strides = [1, 1]} : vector<8x16xf32> to vector<8x1xf32>
    %22 = arith.fptosi %21 : vector<8x1xf32> to vector<8x1xi32>
    %c18_i32 = arith.constant 18 : i32
    %23 = vector.broadcast %c18_i32 : i32 to vector<8x1xi32>
    %24 = arith.addi %22, %23 : vector<8x1xi32>
    %25 = vector.broadcast %24 : vector<8x1xi32> to vector<8x23xi32>
    %26 = arith.cmpi eq, %25, %3 : vector<8x23xi32>
    %27 = arith.extui %26 : vector<8x23xi1> to vector<8x23xi32>
    %28 = arith.sitofp %27 : vector<8x23xi32> to vector<8x23xf32>
    %29 = arith.addf %20, %28 : vector<8x23xf32>
    %c0_3 = arith.constant 0 : index
    %c0_4 = arith.constant 0 : index
    %30 = vector.load %arg2[%c0_3, %c0_4] : memref<1x23xf32, #tpu.memory_space<vmem>>, vector<1x23xf32>
    %cst_5 = arith.constant dense<0.000000e+00> : vector<1x8xf32>
    %31 = tpu.matmul %30, %29, %cst_5 {dimension_numbers = #tpu.dot_dimension_numbers<[1], [1], [0], [0], [0, 0, 1, 0], [], []>} : vector<1x23xf32>, vector<8x23xf32>, vector<1x8xf32> -> vector<1x8xf32>
    %32 = arith.addf %2, %31 : vector<1x8xf32>
    %c0_6 = arith.constant 0 : index
    %c0_7 = arith.constant 0 : index
    %33 = vector.load %arg4[%c0_6, %c0_7] : memref<1x8xf32, #tpu.memory_space<vmem>>, vector<1x8xf32>
    tpu.vector_store %arg4[%c0_6, %c0_7], %32 {strides = array<i32>} : memref<1x8xf32, #tpu.memory_space<vmem>>, vector<1x8xf32>,
    return
  }
  func.func @transform_0(%arg0: i32) -> (i32, i32) {
    %c0_i32 = arith.constant 0 : i32
    %c0_i32_0 = arith.constant 0 : i32
    return %arg0, %c0_i32 : i32, i32
  }
  func.func @transform_1(%arg0: i32) -> (i32, i32) {
    %c0_i32 = arith.constant 0 : i32
    %c0_i32_0 = arith.constant 0 : i32
    %c0_i32_1 = arith.constant 0 : i32
    return %c0_i32, %c0_i32_0 : i32, i32
  }
  func.func @transform_2(%arg0: i32) -> (i32, i32) {
    %c0_i32 = arith.constant 0 : i32
    %c0_i32_0 = arith.constant 0 : i32
    %c0_i32_1 = arith.constant 0 : i32
    return %c0_i32, %c0_i32_0 : i32, i32
  }
  func.func @transform_3(%arg0: i32) -> (i32, i32) {
    %c0_i32 = arith.constant 0 : i32
    %c0_i32_0 = arith.constant 0 : i32
    return %c0_i32, %arg0 : i32, i32
  }
}

</mosaic_0001>

<llo_original>
// kernel: tpu_custom_call.1
$region0: #{tpu_custom_call.1}
  #allocation0 [shape = 'u32[]', space=smem, size = 0x4, offset = 0x4, fixed_abs, tag = 'smem constant byte address 0x4 - core index']
  #allocation1 [shape = 'u32[144,128]{1,0:T(1,128)}', space=vmem, size = 0x12000, scoped, tag = 'internal scratch']
  %s0 = inlined_call_operand.hbm [shape: f32[8,16], index: 0, kind: input, shape index: {}]
  %s1 = inlined_call_operand.vmem [shape: f32[1,23], index: 1, kind: input, shape index: {}]
  %s2 = inlined_call_operand.vmem [shape: f32[1,16], index: 2, kind: input, shape index: {}]
  %s3 = inlined_call_operand.hbm [shape: f32[1,8], index: 3, kind: output, shape index: {}]
  %s4 = sld [smem:[#allocation0]]
  $region26: #{tpu_custom_call.1} parent=0
    _
  %s6 = ssub.s32 1, %s4
  %s7 = scalar_select 0, %s6, %s4
  $region1: #{tpu_custom_call.1} parent=0
    #allocation2 [shape = 'u8[4096]{0}', space=vmem, size = 0x1000, scoped, tag = 'input window, operand 0, single buffered']
    #allocation3 [shape = 's32[1]{0}', space=sflag, size = 0x4, scoped, tag = 'scoped memory for tpu_custom_call.1']
    #allocation4 [shape = 's32[1]{0}', space=sflag, size = 0x4, scoped, tag = 'scoped memory for tpu_custom_call.1']
    #allocation5 [shape = 'u8[512]{0}', space=vmem, size = 0x400, scoped, tag = 'output window, operand 0, single buffered']
    %8 = vsyncpa [#allocation3], 0
    %9 = vsyncpa [#allocation4], 0
    // Predicated region
    $region2: #{tpu_custom_call.1} parent=1 // pred_check
      _
    $region3: #{tpu_custom_call.1} parent=1 // pred_check_branch
      %11 = sbr.rel (0) target = $region5
    $region4: #{tpu_custom_call.1} parent=1 // pred_region
      %s13 = ssub.s32 128, 128
      %14 = vsyncadd [#allocation3], %s13
      %s16 = sshll.u32 [#allocation2], 4
      %s17 = int_to_ptr.vmem [resolvable:$true] %s16
      %19 = dma.hbm_to_vmem [thread:$0]  %s0, 128, %s17, [#allocation3]
    $region5: #{tpu_custom_call.1} parent=1 // pred_fallthru
      _
    // Predicated region
    $region6: #{tpu_custom_call.1} parent=1 // pred_check
      _
    $region7: #{tpu_custom_call.1} parent=1 // pred_check_branch
      %21 = sbr.rel (0) target = $region9
    $region8: #{tpu_custom_call.1} parent=1 // pred_region
      _
    $region9: #{tpu_custom_call.1} parent=1 // pred_fallthru
      _
    // Predicated region
    $region10: #{tpu_custom_call.1} parent=1 // pred_check
      _
    $region11: #{tpu_custom_call.1} parent=1 // pred_check_branch
      %23 = sbr.rel (0) target = $region13
    $region12: #{tpu_custom_call.1} parent=1 // pred_region
      _
    $region13: #{tpu_custom_call.1} parent=1 // pred_fallthru
      _
    // Predicated region
    $region14: #{tpu_custom_call.1} parent=1 // pred_check
      _
    $region15: #{tpu_custom_call.1} parent=1 // pred_check_branch
      %25 = sbr.rel (0) target = $region17
    $region16: #{tpu_custom_call.1} parent=1 // pred_region
      %26 = dma.done [#allocation3], 128
    $region17: #{tpu_custom_call.1} parent=1 // pred_fallthru
      _
    %v27 = vld [vmem:[#allocation2] sm:$0xff]
    %v28 = vld [vmem:[%s2] sm:$0x1]
    %v29 = vlaneseq
    %v30 = vand.u32 %v29, 127
    %v31 = vcvt.f32.s32.to.zero.pseudo %v27
    %32 = vset.pattern.permute.xlu0 0
    %33 = vperm.xlu0 %32, %v31
    %v34 = vpop.permute.xlu0 %33
    %vm35 = vcmp.eq.s32.totalorder %v34, %v30
    %v36 = vsel %vm35, 1, 0
    %v37 = vcvt.s32.f32 %v36
    %v38 = vadd.s32 %v31, 7
    %39 = vset.pattern.permute.xlu0 1
    %40 = vperm.xlu0 %39, %v38
    %v41 = vpop.permute.xlu0 %40
    %vm42 = vcmp.eq.s32.totalorder %v41, %v30
    %v43 = vsel %vm42, 1, 0
    %v44 = vcvt.s32.f32 %v43
    %v45 = vadd.f32 %v37, %v44
    %v46 = vadd.s32 %v31, 18
    %47 = vset.pattern.permute.xlu0 2
    %48 = vperm.xlu0 %47, %v46
    %v49 = vpop.permute.xlu0 %48
    %vm50 = vcmp.eq.s32.totalorder %v49, %v30
    %v51 = vsel %vm50, 1, 0
    %v52 = vcvt.s32.f32 %v51
    %v53 = vadd.f32 %v45, %v52
    %v54 = vld [vmem:[%s1] sm:$0x1]
    %vm55 = vcmask 187392
    %v57 = vsel %vm55, %v54, 0
    %v60 = vsel %vm55, %v53, 0
    %62 = vmatprep.subr.mxu0 0.0
    %63 = vmatpush1.xpose.msra.mxu0 0.0
    %64 = vmatprep.subr.mxu0 0.0
    %65 = vmatpush1.xpose.msra.mxu0 0.0
    %66 = vmatprep.subr.mxu0 0.0
    %67 = vmatpush1.xpose.msra.mxu0 0.0
    %68 = vmatprep.subr.mxu0 0.0
    %69 = vmatpush1.xpose.msra.mxu0 0.0
    %70 = vmatprep.subr.mxu0 0.0
    %71 = vmatpush1.xpose.msra.mxu0 0.0
    %72 = vmatprep.subr.mxu0 0.0
    %73 = vmatpush1.xpose.msra.mxu0 0.0
    %74 = vmatprep.subr.mxu0 0.0
    %75 = vmatpush1.xpose.msra.mxu0 0.0
    %76 = vmatprep.subr.mxu0 0.0
    %77 = vmatpush1.xpose.msra.mxu0 0.0
    %78 = vmatprep.subr.mxu0 0.0
    %79 = vmatpush1.xpose.msra.mxu0 0.0
    %80 = vmatprep.subr.mxu0 0.0
    %81 = vmatpush1.xpose.msra.mxu0 0.0
    %82 = vmatprep.subr.mxu0 0.0
    %83 = vmatpush1.xpose.msra.mxu0 0.0
    %84 = vmatprep.subr.mxu0 0.0
    %85 = vmatpush1.xpose.msra.mxu0 0.0
    %86 = vmatprep.subr.mxu0 0.0
    %87 = vmatpush1.xpose.msra.mxu0 0.0
    %88 = vmatprep.subr.mxu0 0.0
    %89 = vmatpush1.xpose.msra.mxu0 0.0
    %90 = vmatprep.subr.mxu0 0.0
    %91 = vmatpush1.xpose.msra.mxu0 0.0
    %92 = vmatprep.subr.mxu0 0.0
    %93 = vmatpush1.xpose.msra.mxu0 %v60
    %94 = vmatprep.subr.mxu0 0.0
    %95 = vmatpush2.xpose.msra.mxu0 0.0
    %96 = vmatprep.subr.mxu0 0.0
    %97 = vmatpush2.xpose.msra.mxu0 0.0
    %98 = vmatprep.subr.mxu0 0.0
    %99 = vmatpush2.xpose.msra.mxu0 0.0
    %100 = vmatprep.subr.mxu0 0.0
    %101 = vmatpush2.xpose.msra.mxu0 0.0
    %102 = vmatprep.subr.mxu0 0.0
    %103 = vmatpush2.xpose.msra.mxu0 0.0
    %104 = vmatprep.subr.mxu0 0.0
    %105 = vmatpush2.xpose.msra.mxu0 0.0
    %106 = vmatprep.subr.mxu0 0.0
    %107 = vmatpush2.xpose.msra.mxu0 0.0
    %108 = vmatprep.subr.mxu0 0.0
    %109 = vmatpush2.xpose.msra.mxu0 0.0
    %110 = vmatprep.subr.mxu0 0.0
    %111 = vmatpush2.xpose.msra.mxu0 0.0
    %112 = vmatprep.subr.mxu0 0.0
    %113 = vmatpush2.xpose.msra.mxu0 0.0
    %114 = vmatprep.subr.mxu0 0.0
    %115 = vmatpush2.xpose.msra.mxu0 0.0
    %116 = vmatprep.subr.mxu0 0.0
    %117 = vmatpush2.xpose.msra.mxu0 0.0
    %118 = vmatprep.subr.mxu0 0.0
    %119 = vmatpush2.xpose.msra.mxu0 0.0
    %120 = vmatprep.subr.mxu0 0.0
    %121 = vmatpush2.xpose.msra.mxu0 0.0
    %122 = vmatprep.subr.mxu0 0.0
    %123 = vmatpush2.xpose.msra.mxu0 0.0
    %124 = vmatprep.subr.mxu0 0.0
    %125 = vmatpush2.xpose.msra.mxu0 0.0
    %126 = vmatprep.mubr.f32.mxu0 0.0
    %127 = vmatmul.mubr.f32.gmra.mxu0 %v57
    %v128 = vpop.f32.mrf.mxu0
    %v129 = vadd.f32 0.0, %v128
    %v130 = vpop.f32.mrf.mxu0
    %131 = vdwg.mxu0
    %vm132 = vcmask 130048
    %v134 = vsel %vm132, %v28, 0
    %v137 = vsel %vm132, %v27, 0
    %139 = vmatprep.subr.mxu0 0.0
    %140 = vmatpush1.xpose.msra.mxu0 0.0
    %141 = vmatprep.subr.mxu0 0.0
    %142 = vmatpush1.xpose.msra.mxu0 0.0
    %143 = vmatprep.subr.mxu0 0.0
    %144 = vmatpush1.xpose.msra.mxu0 0.0
    %145 = vmatprep.subr.mxu0 0.0
    %146 = vmatpush1.xpose.msra.mxu0 0.0
    %147 = vmatprep.subr.mxu0 0.0
    %148 = vmatpush1.xpose.msra.mxu0 0.0
    %149 = vmatprep.subr.mxu0 0.0
    %150 = vmatpush1.xpose.msra.mxu0 0.0
    %151 = vmatprep.subr.mxu0 0.0
    %152 = vmatpush1.xpose.msra.mxu0 0.0
    %153 = vmatprep.subr.mxu0 0.0
    %154 = vmatpush1.xpose.msra.mxu0 0.0
    %155 = vmatprep.subr.mxu0 0.0
    %156 = vmatpush1.xpose.msra.mxu0 0.0
    %157 = vmatprep.subr.mxu0 0.0
    %158 = vmatpush1.xpose.msra.mxu0 0.0
    %159 = vmatprep.subr.mxu0 0.0
    %160 = vmatpush1.xpose.msra.mxu0 0.0
    %161 = vmatprep.subr.mxu0 0.0
    %162 = vmatpush1.xpose.msra.mxu0 0.0
    %163 = vmatprep.subr.mxu0 0.0
    %164 = vmatpush1.xpose.msra.mxu0 0.0
    %165 = vmatprep.subr.mxu0 0.0
    %166 = vmatpush1.xpose.msra.mxu0 0.0
    %167 = vmatprep.subr.mxu0 0.0
    %168 = vmatpush1.xpose.msra.mxu0 0.0
    %169 = vmatprep.subr.mxu0 0.0
    %170 = vmatpush1.xpose.msra.mxu0 %v137
    %171 = vmatprep.subr.mxu0 0.0
    %172 = vmatpush2.xpose.msra.mxu0 0.0
    %173 = vmatprep.subr.mxu0 0.0
    %174 = vmatpush2.xpose.msra.mxu0 0.0
    %175 = vmatprep.subr.mxu0 0.0
    %176 = vmatpush2.xpose.msra.mxu0 0.0
    %177 = vmatprep.subr.mxu0 0.0
    %178 = vmatpush2.xpose.msra.mxu0 0.0
    %179 = vmatprep.subr.mxu0 0.0
    %180 = vmatpush2.xpose.msra.mxu0 0.0
    %181 = vmatprep.subr.mxu0 0.0
    %182 = vmatpush2.xpose.msra.mxu0 0.0
    %183 = vmatprep.subr.mxu0 0.0
    %184 = vmatpush2.xpose.msra.mxu0 0.0
    %185 = vmatprep.subr.mxu0 0.0
    %186 = vmatpush2.xpose.msra.mxu0 0.0
    %187 = vmatprep.subr.mxu0 0.0
    %188 = vmatpush2.xpose.msra.mxu0 0.0
    %189 = vmatprep.subr.mxu0 0.0
    %190 = vmatpush2.xpose.msra.mxu0 0.0
    %191 = vmatprep.subr.mxu0 0.0
    %192 = vmatpush2.xpose.msra.mxu0 0.0
    %193 = vmatprep.subr.mxu0 0.0
    %194 = vmatpush2.xpose.msra.mxu0 0.0
    %195 = vmatprep.subr.mxu0 0.0
    %196 = vmatpush2.xpose.msra.mxu0 0.0
    %197 = vmatprep.subr.mxu0 0.0
    %198 = vmatpush2.xpose.msra.mxu0 0.0
    %199 = vmatprep.subr.mxu0 0.0
    %200 = vmatpush2.xpose.msra.mxu0 0.0
    %201 = vmatprep.subr.mxu0 0.0
    %202 = vmatpush2.xpose.msra.mxu0 0.0
    %203 = vmatprep.mubr.f32.mxu0 0.0
    %204 = vmatmul.mubr.f32.gmra.mxu0 %v134
    %v205 = vpop.f32.mrf.mxu0
    %v206 = vadd.f32 %v129, %v205
    %v207 = vpop.f32.mrf.mxu0
    %208 = vdwg.mxu0
    %vm209 = vcmask 57344
    %210 = vst.msk [vmem:[#allocation5] sm:$0x1] %vm209, %v206
    // Predicated region
    $region18: #{tpu_custom_call.1} parent=1 // pred_check
      _
    $region19: #{tpu_custom_call.1} parent=1 // pred_check_branch
      %212 = sbr.rel (0) target = $region21
    $region20: #{tpu_custom_call.1} parent=1 // pred_region
      %s214 = ssub.s32 16, 16
      %215 = vsyncadd [#allocation4], %s214
      %s217 = sshll.u32 [#allocation5], 4
      %s218 = int_to_ptr.vmem [resolvable:$true] %s217
      %220 = dma.vmem_to_hbm [thread:$0]  %s218, 16, %s3, [#allocation4]
    $region21: #{tpu_custom_call.1} parent=1 // pred_fallthru
      _
    // Predicated region
    $region22: #{tpu_custom_call.1} parent=1 // pred_check
      _
    $region23: #{tpu_custom_call.1} parent=1 // pred_check_branch
      %222 = sbr.rel (0) target = $region25
    $region24: #{tpu_custom_call.1} parent=1 // pred_region
      %223 = dma.done [#allocation4], 16
    $region25: #{tpu_custom_call.1} parent=1 // pred_fallthru
      _
    %224 = vsyncpa [#allocation3], 1
    %225 = vsyncpa [#allocation4], 1

</llo_original>
